<compile_context>
chip_gen: v7x
topology: tpu7x:2x2x1
jax: 0.10.0
libtpu: 0.0.40
codegen_flags: <defaults>
</compile_context>

<pallas_src>
import functools
import math

import jax
import jax.numpy as jnp
from jax.experimental import pallas as pl
from jax.experimental.pallas import tpu as pltpu


_LANE = 128
_SUBLANE_PACK = {4: 8, 2: 16, 1: 32}   # f32 / bf16 / int8-fp8 sublane packing


def _cdiv(a, b):
    return -(-a // b)


def _round_up(x, m):
    return _cdiv(x, m) * m


def _chip_info():
    """(vmem_capacity_bytes, multiple TensorCores share the grid?) — defensive."""
    vmem_cap = 64 * 1024 * 1024     # conservative default (v7x per-TC VMEM)
    multi_tc = True                 # conservative: assume 2 TCs share the grid
    try:
        kind = jax.devices()[0].device_kind.lower()
        if "v5" in kind or "v6" in kind:
            vmem_cap, multi_tc = 128 * 1024 * 1024, False
        elif "v4" in kind:
            vmem_cap, multi_tc = 32 * 1024 * 1024, True
        elif "v2" in kind or "v3" in kind:
            vmem_cap, multi_tc = 16 * 1024 * 1024, False
    except Exception:
        pass
    try:
        cap = int(getattr(pltpu.get_tpu_info(), "vmem_capacity_bytes", 0))
        if cap >= (16 << 20):
            vmem_cap = cap
    except Exception:
        pass
    return vmem_cap, multi_tc


def _mean_dim0_kernel(x_ref, o_ref, acc_ref, *, inv_n, n_rows, t_n, group,
                      needs_mask):
    """Grid = (lane tiles [parallel], batch tiles [arbitrary, innermost])."""
    k = pl.program_id(1)
    nk = pl.num_programs(1)

    @pl.when(k == 0)
    def _init():
        acc_ref[...] = jnp.zeros_like(acc_ref)

    n_groups = t_n // group

    def accumulate(masked):
        def add_group(start):
            xg = x_ref[pl.ds(start, group), :].astype(jnp.float32)
            if masked:
                # Zero rows past the true batch size (only the last batch tile
                # can contain them — this branch is gated to that tile).
                row = jax.lax.broadcasted_iota(jnp.int32, xg.shape, 0)
                row = row + (k * t_n + start)
                xg = jnp.where(row < n_rows, xg, 0.0)
            acc_ref[...] += xg            # pure VPU elementwise accumulation

        if n_groups == 1:
            add_group(0)
        else:
            def body(g, carry):
                add_group(pl.multiple_of(g * group, group))
                return carry
            jax.lax.fori_loop(0, n_groups, body, 0)

    if needs_mask:
        @pl.when(k != nk - 1)
        def _bulk():
            accumulate(False)

        @pl.when(k == nk - 1)
        def _ragged_tail():
            accumulate(True)
    else:
        accumulate(False)

    @pl.when(k == nk - 1)
    def _finalize():
        # Single cross-sublane (XLU) collapse per lane tile.
        total = jnp.sum(acc_ref[...], axis=0, keepdims=True)
        o_ref[...] = (total * inv_n).astype(o_ref.dtype)


def mean_state(x):
    """Equivalent of MeanState.forward: returns (mean over dim 0, None)."""
    N = x.shape[0]
    rest = x.shape[1:]
    M = math.prod(rest) if rest else 1
    x2 = x.reshape(N, M)
    itemsize = jnp.dtype(x2.dtype).itemsize
    sub = _SUBLANE_PACK.get(itemsize, 8)

    vmem_cap, multi_tc = _chip_info()
    budget = min(vmem_cap * 7 // 10, 96 * 1024 * 1024)

    # ---- lane (flattened feature) tile -------------------------------------
    # Per-lane VMEM cost of the sublane-padded double-buffered output plus the
    # f32 accumulator; cap tile_m so this stays <= budget/4, leaving >= 3/4 of
    # the budget for the double-buffered input block.
    oa_per_lane = 2 * sub * itemsize + max(8, sub) * 4
    tile_m_cap = max(_LANE, ((budget // 4) // oa_per_lane) // _LANE * _LANE)

    if M > tile_m_cap:
        tile_m = tile_m_cap                       # multiple of 128
    elif multi_tc and M >= 2 * _LANE:
        tile_m = _round_up(_cdiv(M, 2), _LANE)    # >=2 lane tiles -> feed 2 TCs
    else:
        tile_m = M                                # full width, contiguous rows
    lane_tiles = _cdiv(M, tile_m)
    # NOTE: for very small M with huge N on multi-TC chips, a second parallel
    # grid axis over batch halves (partial sums combined in the wrapper) would
    # engage both cores; left out to keep the reduction single-axis.

    # ---- batch (reduction) tile --------------------------------------------
    in_budget = budget - oa_per_lane * tile_m
    rows = max(sub, (in_budget // (2 * tile_m * itemsize)) // sub * sub)
    if N < sub:
        t_n, group = N, N          # full-dim block: legal for any N, no mask
    else:
        t_n = min((N // sub) * sub, rows)   # multiple of the dtype sublane pack
        group = sub
    k_tiles = _cdiv(N, t_n)
    needs_mask = (N % t_n) != 0

    footprint = (2 * t_n * tile_m * itemsize          # double-buffered input
                 + 2 * sub * tile_m * itemsize        # padded, double-buffered out
                 + max(8, group) * tile_m * 4)        # f32 accumulator
    vmem_limit = int(min(vmem_cap * 7 // 8, max(footprint + (8 << 20), 32 << 20)))

    kernel = functools.partial(
        _mean_dim0_kernel, inv_n=1.0 / N, n_rows=N, t_n=t_n, group=group,
        needs_mask=needs_mask)

    out = pl.pallas_call(
        kernel,
        out_shape=jax.ShapeDtypeStruct((1, M), x.dtype),
        grid_spec=pltpu.PrefetchScalarGridSpec(
            num_scalar_prefetch=0,
            grid=(lane_tiles, k_tiles),               # reduction axis last
            in_specs=[pl.BlockSpec((t_n, tile_m), lambda j, k: (k, j))],
            out_specs=pl.BlockSpec((1, tile_m), lambda j, k: (0, j)),
            scratch_shapes=[pltpu.VMEM((group, tile_m), jnp.float32)],
        ),
        compiler_params=pltpu.CompilerParams(
            dimension_semantics=("parallel", "arbitrary"),
            vmem_limit_bytes=vmem_limit,
        ),
    )(x2)

    return out.reshape(rest), None


if __name__ == "__main__":
    key = jax.random.PRNGKey(0)

    # Primary check: small NCHW input consistent with the module's forward.
    x = jax.random.normal(key, (2, 4, 16, 16), dtype=jnp.float32)
    y, aux = mean_state(x)
    y = jax.block_until_ready(y)
    y_ref = jnp.mean(x, axis=0)
    assert aux is None
    assert y.shape == y_ref.shape == (4, 16, 16)
    assert jnp.allclose(y, y_ref, atol=1e-6, rtol=1e-6)

    # Ragged feature width (partial lane block on multi-TC chips).
    x2 = jax.random.normal(jax.random.PRNGKey(1), (3, 5, 7, 9), dtype=jnp.float32)
    y2, aux2 = mean_state(x2)
    y2 = jax.block_until_ready(y2)
    y2_ref = jnp.mean(x2, axis=0)
    assert aux2 is None
    assert y2.shape == y2_ref.shape == (5, 7, 9)
    assert jnp.allclose(y2, y2_ref, atol=1e-6, rtol=1e-6)

    # Batch not a multiple of the sublane pack: exercises the masked last batch
    # tile, the multi-step reduction grid and the in-kernel group loop.
    x3 = jax.random.normal(jax.random.PRNGKey(2), (20, 4, 16, 16), dtype=jnp.float32)
    y3, _ = mean_state(x3)
    y3 = jax.block_until_ready(y3)
    y3_ref = jnp.mean(x3, axis=0)
    assert y3.shape == y3_ref.shape == (4, 16, 16)
    assert jnp.allclose(y3, y3_ref, atol=1e-5, rtol=1e-5)

    # bf16 path (dtype-dependent sublane pack, f32 accumulation).
    x4 = jax.random.normal(jax.random.PRNGKey(3), (4, 8, 128), dtype=jnp.bfloat16)
    y4, _ = mean_state(x4)
    y4 = jax.block_until_ready(y4)
    y4_ref = jnp.mean(x4.astype(jnp.float32), axis=0).astype(jnp.bfloat16)
    assert y4.shape == y4_ref.shape == (8, 128)
    assert jnp.allclose(y4.astype(jnp.float32), y4_ref.astype(jnp.float32),
                        atol=1e-2, rtol=1e-2)

    print("KERNEL_OK")
</pallas_src>

<mosaic_0001>
module attributes {stable_mosaic.version = 11 : i64} {
  func.func @_mean_dim0_kernel(%arg0: i32, %arg1: i32, %arg2: memref<2x512xf32, #tpu.memory_space<vmem>>, %arg3: memref<1x512xf32, #tpu.memory_space<vmem>>, %arg4: memref<2x512xf32, #tpu.memory_space<vmem>>) attributes {dimension_semantics = [#tpu.dimension_semantics<parallel>, #tpu.dimension_semantics<arbitrary>], iteration_bounds = array<i64: 2, 1>, scalar_prefetch = 0 : i64, scratch_operands = 1 : i64, tpu.core_type = #tpu.core_type<tc>, window_params = [{transform_indices = @transform_0, window_bounds = array<i64: 2, 512>}, {transform_indices = @transform_1, window_bounds = array<i64: 1, 512>}]} {
    %c0_i32 = arith.constant 0 : i32
    %0 = arith.cmpi eq, %arg1, %c0_i32 : i32
    %1 = arith.extui %0 : i1 to i32
    %c0_i32_0 = arith.constant 0 : i32
    %2 = arith.cmpi ne, %1, %c0_i32_0 : i32
    scf.if %2 {
      %cst = arith.constant 0.000000e+00 : f32
      %10 = vector.broadcast %cst : f32 to vector<2x512xf32>
      %c0_8 = arith.constant 0 : index
      %c0_9 = arith.constant 0 : index
      %11 = vector.load %arg4[%c0_8, %c0_9] : memref<2x512xf32, #tpu.memory_space<vmem>>, vector<2x512xf32>
      tpu.vector_store %arg4[%c0_8, %c0_9], %10 {strides = array<i32>} : memref<2x512xf32, #tpu.memory_space<vmem>>, vector<2x512xf32>,
    } else {
    }
    %c0 = arith.constant 0 : index
    %c0_1 = arith.constant 0 : index
    %3 = vector.load %arg2[%c0, %c0_1] : memref<2x512xf32, #tpu.memory_space<vmem>>, vector<2x512xf32>
    %c0_2 = arith.constant 0 : index
    %c0_3 = arith.constant 0 : index
    %4 = vector.load %arg4[%c0_2, %c0_3] : memref<2x512xf32, #tpu.memory_space<vmem>>, vector<2x512xf32>
    %5 = arith.addf %4, %3 : vector<2x512xf32>
    %c0_4 = arith.constant 0 : index
    %c0_5 = arith.constant 0 : index
    %6 = vector.load %arg4[%c0_4, %c0_5] : memref<2x512xf32, #tpu.memory_space<vmem>>, vector<2x512xf32>
    tpu.vector_store %arg4[%c0_4, %c0_5], %5 {strides = array<i32>} : memref<2x512xf32, #tpu.memory_space<vmem>>, vector<2x512xf32>,
    %c0_i32_6 = arith.constant 0 : i32
    %7 = arith.cmpi eq, %arg1, %c0_i32_6 : i32
    %8 = arith.extui %7 : i1 to i32
    %c0_i32_7 = arith.constant 0 : i32
    %9 = arith.cmpi ne, %8, %c0_i32_7 : i32
    scf.if %9 {
      %c0_8 = arith.constant 0 : index
      %c0_9 = arith.constant 0 : index
      %10 = vector.load %arg4[%c0_8, %c0_9] : memref<2x512xf32, #tpu.memory_space<vmem>>, vector<2x512xf32>
      %cst = arith.constant dense<0.000000e+00> : vector<512xf32>
      %11 = vector.multi_reduction <add>, %10, %cst [0] : vector<2x512xf32> to vector<512xf32>
      %12 = vector.shape_cast %11 : vector<512xf32> to vector<1x512xf32>
      %cst_10 = arith.constant 5.000000e-01 : f32
      %13 = vector.broadcast %cst_10 : f32 to vector<1x512xf32>
      %14 = arith.mulf %12, %13 : vector<1x512xf32>
      %c0_11 = arith.constant 0 : index
      %c0_12 = arith.constant 0 : index
      %15 = vector.load %arg3[%c0_11, %c0_12] : memref<1x512xf32, #tpu.memory_space<vmem>>, vector<1x512xf32>
      tpu.vector_store %arg3[%c0_11, %c0_12], %14 {strides = array<i32>} : memref<1x512xf32, #tpu.memory_space<vmem>>, vector<1x512xf32>,
    } else {
    }
    return
  }
  func.func @transform_0(%arg0: i32, %arg1: i32) -> (i32, i32) {
    %c0_i32 = arith.constant 0 : i32
    return %arg1, %arg0 : i32, i32
  }
  func.func @transform_1(%arg0: i32, %arg1: i32) -> (i32, i32) {
    %c0_i32 = arith.constant 0 : i32
    %c0_i32_0 = arith.constant 0 : i32
    return %c0_i32, %arg0 : i32, i32
  }
}

</mosaic_0001>

<llo_original>
// kernel: tpu_custom_call.1
$region0: #{tpu_custom_call.1}
  #allocation0 [shape = 'u32[]', space=smem, size = 0x4, offset = 0x4, fixed_abs, tag = 'smem constant byte address 0x4 - core index']
  #allocation1 [shape = 'u32[144,128]{1,0:T(1,128)}', space=vmem, size = 0x12000, scoped, tag = 'internal scratch']
  #allocation2 [shape = 'f32[2,512]{1,0:T(2,128)}', space=vmem, size = 0x1000, scoped, tag = 'scratch operand']
  %s0 = inlined_call_operand.hbm [shape: f32[2,1024], index: 0, kind: input, shape index: {}]
  %s1 = inlined_call_operand.hbm [shape: f32[1,1024], index: 1, kind: output, shape index: {}]
  %s2 = sld [smem:[#allocation0]]
  $region49: #{tpu_custom_call.1} parent=0
    _
  %s4 = ssub.s32 1, %s2
  %s5 = scalar_select 0, %s4, %s2
  $region1: #{tpu_custom_call.1} parent=0
    #allocation3 [shape = 'u8[8192]{0}', space=vmem, size = 0x2000, scoped, tag = 'input window, operand 0']
    #allocation4 [shape = 's32[2]{0}', space=sflag, size = 0x8, scoped, tag = 'scoped memory for tpu_custom_call.1']
    #allocation5 [shape = 's32[2]{0}', space=sflag, size = 0x8, scoped, tag = 'scoped memory for tpu_custom_call.1']
    #allocation6 [shape = 'u8[4096]{0}', space=vmem, size = 0x1000, scoped, tag = 'output window, operand 0']
    %6 = vsyncpa [#allocation4], 0
    %s7 = scalar_lea.sflag [#allocation4], 1
    %8 = vsyncpa %s7, 0
    %9 = vsyncpa [#allocation5], 0
    %s10 = scalar_lea.sflag [#allocation5], 1
    %11 = vsyncpa %s10, 0
    loop: start=0, step=1, limit=4
    $region2: #{tpu_custom_call.1} parent=1 // loop_pre_header
      _
    $region3: #{tpu_custom_call.1} parent=1 // loop_header
      %s13 = sphi 0, %s17
      %p14 = scmp.ge.s32.totalorder %s13, 4
      %s20 = sphi 0, %s32
      %s21 = sphi 0, %s28
      %s22 = sphi 0, %s20
      %s23 = sphi 0, %s21
      %s24 = sphi 0, %s22
      %s25 = sphi 0, %s23
      %s37 = sphi 0, %s39
      %s40 = sphi 0, %s37
      %s41 = sphi 0, %s40
      %s57 = sphi 0, %s41
      %s63 = sphi 0, %s65
      %s66 = sphi 0, %s63
      %s67 = sphi 0, %s66
      %s83 = sphi 0, %s67
    $region4: #{tpu_custom_call.1} parent=1 // loop_header_branch
      %16 = sbr.rel (%p14) target = $region8
    $region5: #{tpu_custom_call.1} parent=1 // loop_body
      %s18 = ssub.s32 %s13, 1
      %s19 = ssub.s32 %s13, 2
      %s26 = sadd.s32 1, %s21
      %p27 = scmp.ge.s32.totalorder %s26, 1
      %s28 = scalar_select %p27, 0, %s26
      %s29 = sadd.s32 1, %s20
      %s30 = scalar_select %p27, %s29, %s20
      %p31 = scmp.ge.s32.totalorder %s30, 2
      %s32 = scalar_select %p31, 0, %s30
      %s33 = ssub.s32 %s21, %s28
      %s34 = ssub.s32 %s20, %s32
      %s35 = sor.u32 %s33, %s34
      %p36 = scmp.eq.s32.totalorder %s35, 0
      %s38 = sadd.s32 %s37, 1
      %s39 = scalar_select %p36, %s37, %s38
      %p42 = pneg %p36
      %p43 = scmp.eq.s32.totalorder %s13, 1
      %p44 = por %p42, %p43
      %p45 = scmp.ne.s32.totalorder %s37, %s40
      %p46 = scmp.eq.s32.totalorder %s13, 0
      %p47 = por %p45, %p46
      %p48 = scmp.ne.s32.totalorder %s37, %s40
      %p49 = scmp.eq.s32.totalorder %s18, 1
      %p50 = por %p48, %p49
      %p51 = scmp.ne.s32.totalorder %s40, %s41
      %p52 = scmp.eq.s32.totalorder %s18, 0
      %p53 = por %p51, %p52
      %p54 = scmp.ne.s32.totalorder %s40, %s41
      %p55 = scmp.eq.s32.totalorder %s19, 1
      %p56 = por %p54, %p55
      %p58 = scmp.ne.s32.totalorder %s41, %s57
      %p59 = scmp.eq.s32.totalorder %s19, 0
      %p60 = por %p58, %p59
      %s61 = ssub.s32 %s20, %s32
      %p62 = scmp.eq.s32.totalorder %s61, 0
      %s64 = sadd.s32 %s63, 1
      %s65 = scalar_select %p62, %s63, %s64
      %p68 = pneg %p62
      %p69 = scmp.eq.s32.totalorder %s13, 1
      %p70 = por %p68, %p69
      %p71 = scmp.ne.s32.totalorder %s63, %s66
      %p72 = scmp.eq.s32.totalorder %s13, 0
      %p73 = por %p71, %p72
      %p74 = scmp.ne.s32.totalorder %s63, %s66
      %p75 = scmp.eq.s32.totalorder %s18, 1
      %p76 = por %p74, %p75
      %p77 = scmp.ne.s32.totalorder %s66, %s67
      %p78 = scmp.eq.s32.totalorder %s18, 0
      %p79 = por %p77, %p78
      %p80 = scmp.ne.s32.totalorder %s66, %s67
      %p81 = scmp.eq.s32.totalorder %s19, 1
      %p82 = por %p80, %p81
      %p84 = scmp.ne.s32.totalorder %s67, %s83
      %p85 = scmp.eq.s32.totalorder %s19, 0
      %p86 = por %p84, %p85
      %p87 = scmp.le.s32.totalorder 1, %s13
      %p88 = scmp.lt.s32.totalorder %s13, 3
      %p89 = pnand %p87, %p88
      %p90 = pneg %p89
      // Predicated region
      $region9: #{tpu_custom_call.1} parent=5 // pred_check
        _
      $region10: #{tpu_custom_call.1} parent=5 // pred_check_branch
        %92 = sbr.rel (%p89) target = $region12
      $region11: #{tpu_custom_call.1} parent=5 // pred_region
        %s93 = ssub.s32 %s13, 1
      $region12: #{tpu_custom_call.1} parent=5 // pred_fallthru
        _
      %p94 = scmp.lt.s32.totalorder %s13, 2
      // Predicated region
      $region13: #{tpu_custom_call.1} parent=5 // pred_check
        %p95 = pneg %p94
      $region14: #{tpu_custom_call.1} parent=5 // pred_check_branch
        %97 = sbr.rel (%p95) target = $region16
      $region15: #{tpu_custom_call.1} parent=5 // pred_region
        // Predicated region
        $region17: #{tpu_custom_call.1} parent=15 // pred_check
          %p98 = pneg %p47
        $region18: #{tpu_custom_call.1} parent=15 // pred_check_branch
          %100 = sbr.rel (%p98) target = $region20
        $region19: #{tpu_custom_call.1} parent=15 // pred_region
          %s101 = sand.u32 %s37, 1
          %s102 = scalar_lea.sflag [#allocation4], %s101
          %s103 = sand.u32 %s37, 1
          %s104 = smul.addr %s103, 8
          %s105 = scalar_lea.vmem [#allocation3], %s104
          %s106 = smul.u32 4, %s20
          %s108 = ssub.s32 128, 128
          %109 = vsyncadd %s102, %s108
          %s110 = smul.addr %s21, 8
          %s111 = sadd.s32 %s106, %s110
          %s112 = smul.addr %s111, 32
          %s113 = scalar_lea.hbm %s0, %s112
          %s115 = sshll.u32 %s105, 4
          %s116 = int_to_ptr.vmem [resolvable:$true] %s115
          %118 = dma.hbm_to_vmem [thread:$0]  %s113, 128, %s116, %s102
        $region20: #{tpu_custom_call.1} parent=15 // pred_fallthru
          _
      $region16: #{tpu_custom_call.1} parent=5 // pred_fallthru
        _
      %p119 = scmp.le.s32.totalorder 1, %s13
      %p120 = scmp.lt.s32.totalorder %s13, 3
      %p121 = pnand %p119, %p120
      %p122 = pneg %p121
      // Predicated region
      $region21: #{tpu_custom_call.1} parent=5 // pred_check
        _
      $region22: #{tpu_custom_call.1} parent=5 // pred_check_branch
        %124 = sbr.rel (%p121) target = $region24
      $region23: #{tpu_custom_call.1} parent=5 // pred_region
        %s125 = ssub.s32 %s13, 1
        %s126 = sand.u32 %s40, 1
        %s127 = scalar_lea.sflag [#allocation4], %s126
        %s128 = sand.u32 %s40, 1
        %s129 = smul.addr %s128, 8
        %s130 = scalar_lea.vmem [#allocation3], %s129
        // Predicated region
        $region25: #{tpu_custom_call.1} parent=23 // pred_check
          %p131 = pneg %p53
        $region26: #{tpu_custom_call.1} parent=23 // pred_check_branch
          %133 = sbr.rel (%p131) target = $region28
        $region27: #{tpu_custom_call.1} parent=23 // pred_region
          %134 = dma.done %s127, 128
        $region28: #{tpu_custom_call.1} parent=23 // pred_fallthru
          _
        %s135 = sand.u32 %s40, 1
        %s136 = scalar_lea.sflag [#allocation4], %s135
        %s137 = sand.u32 %s40, 1
        %s138 = smul.addr %s137, 8
        %s139 = scalar_lea.vmem [#allocation3], %s138
        %p140 = pneg %p53
        %p141 = pneg %p50
        %p142 = pneg %p79
        %p143 = pneg %p76
        %s144 = sand.u32 %s66, 1
        %s145 = scalar_lea.sflag [#allocation5], %s144
        %s146 = sand.u32 %s66, 1
        %s147 = smul.addr %s146, 4
        %s148 = scalar_lea.vmem [#allocation6], %s147
        %s149 = smul.u32 4, %s22
        %s150 = smul.u32 4, %s22
        %p151 = scmp.eq.s32.totalorder %s23, 0
        // Predicated region
        $region29: #{tpu_custom_call.1} parent=23 // pred_check
          %p152 = pneg %p151
        $region30: #{tpu_custom_call.1} parent=23 // pred_check_branch
          %154 = sbr.rel (%p152) target = $region32
        $region31: #{tpu_custom_call.1} parent=23 // pred_region
          %155 = vst [vmem:[#allocation2] sm:$0xff] 0.0
        $region32: #{tpu_custom_call.1} parent=23 // pred_fallthru
          _
        %v156 = vld [vmem:[%s130] sm:$0xff]
        %v157 = vld [vmem:[#allocation2] sm:$0xff]
        %v158 = vadd.f32 %v157, %v156
        %159 = vst [vmem:[#allocation2] sm:$0xff] %v158
        // Predicated region
        $region33: #{tpu_custom_call.1} parent=23 // pred_check
          %p160 = pneg %p151
        $region34: #{tpu_custom_call.1} parent=23 // pred_check_branch
          %162 = sbr.rel (%p160) target = $region36
        $region35: #{tpu_custom_call.1} parent=23 // pred_region
          %v163 = vld [vmem:[#allocation2] sm:$0xff]
          %v165 = vcombine.high %v163, %v163
          %v167 = vunpack.c.l.s4 1983009808
          %v168 = vunpack.c.0.s8 %v167
          %v169 = vlaneseq
          %v170 = vshrl.u32 %v169, 7
          %v171 = vsub.s32 %v168, %v170
          %v172 = vrot.slane %v163, %v171
          %v174 = vunpack.c.l.s4 1983009808
          %v175 = vunpack.c.0.s8 %v174
          %v176 = vlaneseq
          %v177 = vshrl.u32 %v176, 7
          %v178 = vsub.s32 %v175, %v177
          %v179 = vrot.slane %v165, %v178
          %v180 = vcombine.high %v172, %v172
          %v181 = vcombine.high %v179, %v179
          %vm186 = vcmask 1041408
          %v187 = vsel %vm186, %v172, 0.0
          %v188 = vrot.slane %v187, 4
          %v189 = vadd.f32 %v187, %v188
          %v190 = vrot.slane %v189, 2
          %v191 = vadd.f32 %v189, %v190
          %v192 = vrot.slane %v191, 1
          %v193 = vadd.f32 %v191, %v192
          %v194 = vsel %vm186, %v180, 0.0
          %v195 = vrot.slane %v194, 4
          %v196 = vadd.f32 %v194, %v195
          %v197 = vrot.slane %v196, 2
          %v198 = vadd.f32 %v196, %v197
          %v199 = vrot.slane %v198, 1
          %v200 = vadd.f32 %v198, %v199
          %v201 = vsel %vm186, %v179, 0.0
          %v202 = vrot.slane %v201, 4
          %v203 = vadd.f32 %v201, %v202
          %v204 = vrot.slane %v203, 2
          %v205 = vadd.f32 %v203, %v204
          %v206 = vrot.slane %v205, 1
          %v207 = vadd.f32 %v205, %v206
          %v208 = vsel %vm186, %v181, 0.0
          %v209 = vrot.slane %v208, 4
          %v210 = vadd.f32 %v208, %v209
          %v211 = vrot.slane %v210, 2
          %v212 = vadd.f32 %v210, %v211
          %v213 = vrot.slane %v212, 1
          %v214 = vadd.f32 %v212, %v213
          %v215 = vmul.f32 %v193, 0.5
          %v216 = vmul.f32 %v200, 0.5
          %v217 = vmul.f32 %v207, 0.5
          %v218 = vmul.f32 %v214, 0.5
          %v223 = vcombine.low %v215, %v216
          %v224 = vcombine.low %v217, %v218
          %v226 = vunpack.c.l.s4 1966171168
          %v227 = vunpack.c.0.s8 %v226
          %v228 = vlaneseq
          %v229 = vshrl.u32 %v228, 7
          %v230 = vsub.s32 %v227, %v229
          %v231 = vrot.slane %v223, %v230
          %v233 = vunpack.c.l.s4 1966171168
          %v234 = vunpack.c.0.s8 %v233
          %v235 = vlaneseq
          %v236 = vshrl.u32 %v235, 7
          %v237 = vsub.s32 %v234, %v236
          %v238 = vrot.slane %v224, %v237
          %v239 = vcombine.low %v231, %v238
          %v241 = vunpack.c.l.s4 1966171168
          %v242 = vunpack.c.0.s8 %v241
          %v243 = vlaneseq
          %v244 = vshrl.u32 %v243, 7
          %v245 = vsub.s32 %v242, %v244
          %v246 = vrot.slane %v239, %v245
          %v248 = vlaneseq
          %vm249 = vcmp.ge.s32.totalorder %v248, 0
          %vm250 = vcmp.lt.s32.totalorder %v248, 512
          %vm251 = vmand %vm249, %vm250
          %252 = vst.msk [vmem:[%s148] sm:$0xf] %vm251, %v246
        $region36: #{tpu_custom_call.1} parent=23 // pred_fallthru
          _
        %s253 = sand.u32 %s66, 1
        %s254 = scalar_lea.sflag [#allocation5], %s253
        %s255 = sand.u32 %s66, 1
        %s256 = smul.addr %s255, 4
        %s257 = scalar_lea.vmem [#allocation6], %s256
        // Predicated region
        $region37: #{tpu_custom_call.1} parent=23 // pred_check
          %p258 = pneg %p76
        $region38: #{tpu_custom_call.1} parent=23 // pred_check_branch
          %260 = sbr.rel (%p258) target = $region40
        $region39: #{tpu_custom_call.1} parent=23 // pred_region
          %s261 = smul.u32 4, %s22
          %s263 = ssub.s32 64, 64
          %264 = vsyncadd %s254, %s263
          %s265 = smul.addr %s261, 16
          %s266 = scalar_lea.hbm %s1, %s265
          %s268 = sshll.u32 %s257, 4
          %s269 = int_to_ptr.vmem [resolvable:$true] %s268
          %271 = dma.vmem_to_hbm [thread:$0]  %s269, 64, %s266, %s254
        $region40: #{tpu_custom_call.1} parent=23 // pred_fallthru
          _
      $region24: #{tpu_custom_call.1} parent=5 // pred_fallthru
        _
      %p272 = scmp.le.s32.totalorder 2, %s13
      // Predicated region
      $region41: #{tpu_custom_call.1} parent=5 // pred_check
        %p273 = pneg %p272
      $region42: #{tpu_custom_call.1} parent=5 // pred_check_branch
        %275 = sbr.rel (%p273) target = $region44
      $region43: #{tpu_custom_call.1} parent=5 // pred_region
        %s276 = ssub.s32 %s13, 2
        // Predicated region
        $region45: #{tpu_custom_call.1} parent=43 // pred_check
          %p277 = pneg %p82
        $region46: #{tpu_custom_call.1} parent=43 // pred_check_branch
          %279 = sbr.rel (%p277) target = $region48
        $region47: #{tpu_custom_call.1} parent=43 // pred_region
          %s280 = sand.u32 %s67, 1
          %s281 = scalar_lea.sflag [#allocation5], %s280
          %s282 = sand.u32 %s67, 1
          %s283 = smul.addr %s282, 4
          %s284 = scalar_lea.vmem [#allocation6], %s283
          %285 = dma.done %s281, 64
        $region48: #{tpu_custom_call.1} parent=43 // pred_fallthru
          _
      $region44: #{tpu_custom_call.1} parent=5 // pred_fallthru
        _
    $region6: #{tpu_custom_call.1} parent=1 // loop_footer
      %s17 = sadd.s32 1, %s13
    $region7: #{tpu_custom_call.1} parent=1 // loop_footer_branch
      %12 = sbr.rel target = $region3
    $region8: #{tpu_custom_call.1} parent=1 // loop_exit
      _
    %286 = vsyncpa [#allocation4], 1
    %s287 = scalar_lea.sflag [#allocation4], 1
    %288 = vsyncpa %s287, 1
    %289 = vsyncpa [#allocation5], 1
    %s290 = scalar_lea.sflag [#allocation5], 1
    %291 = vsyncpa %s290, 1

</llo_original>
